<compile_context>
chip_gen: v6e
topology: v6e:2x2x1
jax: 0.10.0
libtpu: 0.0.40
codegen_flags: <defaults>
</compile_context>

<pallas_src>
import jax
import jax.numpy as jnp
from jax.experimental import pallas as pl
from jax.experimental.pallas import tpu as pltpu

_LANE = 128       # vreg lane width: batch-axis tile granularity
_SUBLANE = 8      # vreg sublane depth: padded action axis
_NEG_BIG = -1e30  # bias on padded action sublanes -> exp() underflows to exactly 0 (keep f32)


def _round_up(x, m):
    return ((x + m - 1) // m) * m


def policy_kernel(x_ref, w1t_ref, b1t_ref, w2t_ref, b2t_ref, o_ref):
    x = x_ref[...]            # (S, TB) -- batch on the lane axis
    w1t = w1t_ref[...]        # (H, S)
    n_state = w1t.shape[1]

    # ---- Layer 1: h^T = W1^T x^T + b1 as S (=2) VPU outer-product FMAs.
    h = b1t_ref[...]          # (H, 1) -> broadcasts across the batch lanes
    for s in range(n_state):  # static unroll; state_size known at trace time
        h = h + w1t[:, s:s + 1] * x[s:s + 1, :]
    h = jnp.maximum(h, 0.0)   # ReLU, (H, TB)

    # ---- Layer 2 on the MXU: logits^T = W2^T h^T -> (A_pad, TB).
    logits = jnp.dot(w2t_ref[...], h, preferred_element_type=jnp.float32)
    logits = logits + b2t_ref[...]       # padded action sublanes carry -1e30

    # ---- Numerically stable softmax over the 8-deep action (sublane) axis.
    m = jnp.max(logits, axis=0, keepdims=True)
    e = jnp.exp(logits - m)              # padded rows underflow to exactly 0
    denom = jnp.sum(e, axis=0, keepdims=True)
    o_ref[...] = (e * pl.reciprocal(denom, approx=False)).astype(o_ref.dtype)


def prepare_policy_params(w1, b1, w2, b2):
    """Pre-transpose / pad the Linear params into kernel layout.  Call ONCE at init.

    w1: (S, H), b1: (H,), w2: (H, A), b2: (A,)   (convention: y = x @ W + b)
    Returns (w1t, b1t, w2t, b2t): (H, S), (H, 1), (A_pad, H), (A_pad, 1), all f32.
    """
    S, H = w1.shape
    A = w2.shape[1]
    a_pad = _round_up(max(A, 1), _SUBLANE)
    w1t = jnp.asarray(w1, jnp.float32).T
    b1t = jnp.asarray(b1, jnp.float32).reshape(H, 1)
    w2t = jnp.zeros((a_pad, H), jnp.float32).at[:A, :].set(jnp.asarray(w2, jnp.float32).T)
    b2t = jnp.full((a_pad, 1), _NEG_BIG, jnp.float32).at[:A, 0].set(
        jnp.asarray(b2, jnp.float32).reshape(A))
    return w1t, b1t, w2t, b2t


def _pick_batch_tile(B, block_b):
    """Lane-axis batch tile: big (amortize per-step cost), even #steps >= 2 when possible
    (so dimension_semantics=('parallel',) splits work across both v7x TensorCores)."""
    block_b = max(_LANE, _round_up(block_b, _LANE))
    if B < 2 * _LANE:
        return B                          # single full-array block (valid: equals array dims)
    n = max(2, pl.cdiv(B, block_b))       # at least 2 grid steps
    if n % 2:
        n += 1                            # even step count -> balanced two-core split
    return min(block_b, _round_up(pl.cdiv(B, n), _LANE))


def policy_forward(state, w1t, b1t, w2t, b2t, *, action_size, block_b=4096):
    """state: [B, S] float; returns action probabilities [B, action_size]."""
    B, S = state.shape
    H = w1t.shape[0]
    a_pad = w2t.shape[0]

    xT = state.astype(jnp.float32).T      # (S, B): batch on the lane axis (tiny copy)

    tb = _pick_batch_tile(B, block_b)
    grid = (pl.cdiv(B, tb),)              # ragged final block is masked by Pallas

    out = pl.pallas_call(
        policy_kernel,
        out_shape=jax.ShapeDtypeStruct((a_pad, B), jnp.float32),
        grid=grid,
        in_specs=[
            pl.BlockSpec((S, tb), lambda i: (0, i)),      # x^T: tiled along batch lanes
            pl.BlockSpec((H, S), lambda i: (0, 0)),       # W1^T: loaded once, VMEM-resident
            pl.BlockSpec((H, 1), lambda i: (0, 0)),       # b1:   VMEM-resident
            pl.BlockSpec((a_pad, H), lambda i: (0, 0)),   # W2^T (sublane-padded)
            pl.BlockSpec((a_pad, 1), lambda i: (0, 0)),   # b2   (sublane-padded with -1e30)
        ],
        out_specs=pl.BlockSpec((a_pad, tb), lambda i: (0, i)),
        compiler_params=pltpu.CompilerParams(
            dimension_semantics=("parallel",)),           # batch tiles -> both TCs on v7x
    )(xT, w1t, b1t, w2t, b2t)

    return out[:action_size, :].T                          # (B, A)


def init_policy_params(key, state_size, action_size, hidden_size):
    """nn.Linear-style init U(-1/sqrt(fan_in), +1/sqrt(fan_in)); W stored [in, out]."""
    k1, k2, k3, k4 = jax.random.split(key, 4)
    bound1 = 1.0 / jnp.sqrt(state_size)
    bound2 = 1.0 / jnp.sqrt(hidden_size)
    w1 = jax.random.uniform(k1, (state_size, hidden_size), jnp.float32, -bound1, bound1)
    b1 = jax.random.uniform(k2, (hidden_size,), jnp.float32, -bound1, bound1)
    w2 = jax.random.uniform(k3, (hidden_size, action_size), jnp.float32, -bound2, bound2)
    b2 = jax.random.uniform(k4, (action_size,), jnp.float32, -bound2, bound2)
    return w1, b1, w2, b2


def _reference(state, w1, b1, w2, b2):
    h = jnp.maximum(state @ w1 + b1[None, :], 0.0)
    return jax.nn.softmax(h @ w2 + b2[None, :], axis=-1)


if __name__ == "__main__":
    # MountainCar sizes: state_size=2, action_size=3, hidden_size=32.
    state_size, action_size, hidden_size = 2, 3, 32

    key = jax.random.PRNGKey(0)
    k_params, k_a, k_b, k_c = jax.random.split(key, 4)
    w1, b1, w2, b2 = init_policy_params(k_params, state_size, action_size, hidden_size)

    # Hoisted out of the per-step path: transpose/pad the params exactly once.
    w1t, b1t, w2t, b2t = prepare_policy_params(w1, b1, w2, b2)

    fwd = jax.jit(policy_forward, static_argnames=("action_size", "block_b"))

    ok = True
    cases = (
        ("batched", 512, k_a),   # 2 even grid steps (two-TC split on v7x)
        ("ragged", 300, k_b),    # ragged final block, masked by Pallas (no wrapper pad)
        ("tiny", 4, k_c),        # single full-array block
    )
    for name, bsz, kk in cases:
        state = jax.random.normal(kk, (bsz, state_size), jnp.float32)
        probs = jax.block_until_ready(
            fwd(state, w1t, b1t, w2t, b2t, action_size=action_size))
        ref = _reference(state, w1, b1, w2, b2)
        ok &= probs.shape == (bsz, action_size)
        ok &= bool(jnp.allclose(probs, ref, atol=1e-5, rtol=1e-5))
        ok &= bool(jnp.allclose(jnp.sum(probs, axis=-1), 1.0, atol=1e-5))

    # TODO(synk): Policy.act() (Categorical sampling + log_prob) is host-side RL glue,
    # not part of the module's forward pass, so it is intentionally not a kernel.
    if ok:
        print("KERNEL_OK")
    else:
        raise SystemExit("numerical mismatch vs reference")
</pallas_src>

<mosaic_0001>
module attributes {stable_mosaic.version = 11 : i64} {
  func.func @policy_kernel(%arg0: i32, %arg1: memref<2x256xf32, #tpu.memory_space<vmem>>, %arg2: memref<32x2xf32, #tpu.memory_space<vmem>>, %arg3: memref<32x1xf32, #tpu.memory_space<vmem>>, %arg4: memref<8x32xf32, #tpu.memory_space<vmem>>, %arg5: memref<8x1xf32, #tpu.memory_space<vmem>>, %arg6: memref<8x256xf32, #tpu.memory_space<vmem>>) attributes {dimension_semantics = [#tpu.dimension_semantics<parallel>], iteration_bounds = array<i64: 2>, scalar_prefetch = 0 : i64, scratch_operands = 0 : i64, tpu.core_type = #tpu.core_type<tc>, window_params = [{transform_indices = @transform_0, window_bounds = array<i64: 2, 256>}, {pipeline_mode = #tpu.pipeline_mode<synchronous>, transform_indices = @transform_1, window_bounds = array<i64: 32, 2>}, {pipeline_mode = #tpu.pipeline_mode<synchronous>, transform_indices = @transform_2, window_bounds = array<i64: 32, 1>}, {pipeline_mode = #tpu.pipeline_mode<synchronous>, transform_indices = @transform_3, window_bounds = array<i64: 8, 32>}, {pipeline_mode = #tpu.pipeline_mode<synchronous>, transform_indices = @transform_4, window_bounds = array<i64: 8, 1>}, {transform_indices = @transform_5, window_bounds = array<i64: 8, 256>}]} {
    %c0 = arith.constant 0 : index
    %c0_0 = arith.constant 0 : index
    %0 = vector.load %arg1[%c0, %c0_0] : memref<2x256xf32, #tpu.memory_space<vmem>>, vector<2x256xf32>
    %c0_1 = arith.constant 0 : index
    %c0_2 = arith.constant 0 : index
    %1 = vector.load %arg2[%c0_1, %c0_2] : memref<32x2xf32, #tpu.memory_space<vmem>>, vector<32x2xf32>
    %c0_3 = arith.constant 0 : index
    %c0_4 = arith.constant 0 : index
    %2 = vector.load %arg3[%c0_3, %c0_4] : memref<32x1xf32, #tpu.memory_space<vmem>>, vector<32x1xf32>
    %3 = vector.extract_strided_slice %1 {offsets = [0, 0], sizes = [32, 1], strides = [1, 1]} : vector<32x2xf32> to vector<32x1xf32>
    %4 = vector.extract_strided_slice %0 {offsets = [0, 0], sizes = [1, 256], strides = [1, 1]} : vector<2x256xf32> to vector<1x256xf32>
    %5 = vector.broadcast %3 : vector<32x1xf32> to vector<32x256xf32>
    %6 = vector.broadcast %4 : vector<1x256xf32> to vector<32x256xf32>
    %7 = arith.mulf %5, %6 : vector<32x256xf32>
    %8 = vector.broadcast %2 : vector<32x1xf32> to vector<32x256xf32>
    %9 = arith.addf %8, %7 : vector<32x256xf32>
    %10 = vector.extract_strided_slice %1 {offsets = [0, 1], sizes = [32, 1], strides = [1, 1]} : vector<32x2xf32> to vector<32x1xf32>
    %11 = vector.extract_strided_slice %0 {offsets = [1, 0], sizes = [1, 256], strides = [1, 1]} : vector<2x256xf32> to vector<1x256xf32>
    %12 = vector.broadcast %10 : vector<32x1xf32> to vector<32x256xf32>
    %13 = vector.broadcast %11 : vector<1x256xf32> to vector<32x256xf32>
    %14 = arith.mulf %12, %13 : vector<32x256xf32>
    %15 = arith.addf %9, %14 : vector<32x256xf32>
    %cst = arith.constant 0.000000e+00 : f32
    %16 = vector.broadcast %cst : f32 to vector<32x256xf32>
    %17 = arith.maximumf %15, %16 : vector<32x256xf32>
    %c0_5 = arith.constant 0 : index
    %c0_6 = arith.constant 0 : index
    %18 = vector.load %arg4[%c0_5, %c0_6] : memref<8x32xf32, #tpu.memory_space<vmem>>, vector<8x32xf32>
    %cst_7 = arith.constant dense<0.000000e+00> : vector<8x256xf32>
    %19 = tpu.matmul %18, %17, %cst_7 {dimension_numbers = #tpu.dot_dimension_numbers<[1], [0], [0], [1], [0, 0, 1, 1], [], []>} : vector<8x32xf32>, vector<32x256xf32>, vector<8x256xf32> -> vector<8x256xf32>
    %c0_8 = arith.constant 0 : index
    %c0_9 = arith.constant 0 : index
    %20 = vector.load %arg5[%c0_8, %c0_9] : memref<8x1xf32, #tpu.memory_space<vmem>>, vector<8x1xf32>
    %21 = vector.broadcast %20 : vector<8x1xf32> to vector<8x256xf32>
    %22 = arith.addf %19, %21 : vector<8x256xf32>
    %cst_10 = arith.constant dense<0xFF800000> : vector<256xf32>
    %23 = vector.multi_reduction <maximumf>, %22, %cst_10 [0] : vector<8x256xf32> to vector<256xf32>
    %24 = vector.shape_cast %23 : vector<256xf32> to vector<1x256xf32>
    %25 = vector.broadcast %24 : vector<1x256xf32> to vector<8x256xf32>
    %26 = arith.subf %22, %25 : vector<8x256xf32>
    %27 = math.exp %26 : vector<8x256xf32>
    %cst_11 = arith.constant dense<0.000000e+00> : vector<256xf32>
    %28 = vector.multi_reduction <add>, %27, %cst_11 [0] : vector<8x256xf32> to vector<256xf32>
    %29 = vector.shape_cast %28 : vector<256xf32> to vector<1x256xf32>
    %30 = tpu.reciprocal %29 : vector<1x256xf32> -> vector<1x256xf32>
    %31 = vector.broadcast %30 : vector<1x256xf32> to vector<8x256xf32>
    %32 = arith.mulf %27, %31 : vector<8x256xf32>
    %c0_12 = arith.constant 0 : index
    %c0_13 = arith.constant 0 : index
    %33 = vector.load %arg6[%c0_12, %c0_13] : memref<8x256xf32, #tpu.memory_space<vmem>>, vector<8x256xf32>
    tpu.vector_store %arg6[%c0_12, %c0_13], %32 {strides = array<i32>} : memref<8x256xf32, #tpu.memory_space<vmem>>, vector<8x256xf32>,
    return
  }
  func.func @transform_0(%arg0: i32) -> (i32, i32) {
    %c0_i32 = arith.constant 0 : i32
    %c0_i32_0 = arith.constant 0 : i32
    return %c0_i32, %arg0 : i32, i32
  }
  func.func @transform_1(%arg0: i32) -> (i32, i32) {
    %c0_i32 = arith.constant 0 : i32
    %c0_i32_0 = arith.constant 0 : i32
    %c0_i32_1 = arith.constant 0 : i32
    return %c0_i32, %c0_i32_0 : i32, i32
  }
  func.func @transform_2(%arg0: i32) -> (i32, i32) {
    %c0_i32 = arith.constant 0 : i32
    %c0_i32_0 = arith.constant 0 : i32
    %c0_i32_1 = arith.constant 0 : i32
    return %c0_i32, %c0_i32_0 : i32, i32
  }
  func.func @transform_3(%arg0: i32) -> (i32, i32) {
    %c0_i32 = arith.constant 0 : i32
    %c0_i32_0 = arith.constant 0 : i32
    %c0_i32_1 = arith.constant 0 : i32
    return %c0_i32, %c0_i32_0 : i32, i32
  }
  func.func @transform_4(%arg0: i32) -> (i32, i32) {
    %c0_i32 = arith.constant 0 : i32
    %c0_i32_0 = arith.constant 0 : i32
    %c0_i32_1 = arith.constant 0 : i32
    return %c0_i32, %c0_i32_0 : i32, i32
  }
  func.func @transform_5(%arg0: i32) -> (i32, i32) {
    %c0_i32 = arith.constant 0 : i32
    %c0_i32_0 = arith.constant 0 : i32
    return %c0_i32, %arg0 : i32, i32
  }
}

</mosaic_0001>

<llo_original>
// kernel: policy_forward.1
$region0: #{policy_forward.1}
  #allocation0 [shape = 'u32[]', space=smem, size = 0x4, offset = 0x4, fixed_abs, tag = 'smem constant byte address 0x4 - core index']
  #allocation1 [shape = 'u32[144,128]{1,0:T(1,128)}', space=vmem, size = 0x12000, scoped, tag = 'internal scratch']
  %s0 = inlined_call_operand.vmem [shape: f32[2,512], index: 0, kind: input, shape index: {}]
  %s1 = inlined_call_operand.vmem [shape: f32[32,2], index: 1, kind: input, shape index: {}]
  %s2 = inlined_call_operand.vmem [shape: f32[32,1], index: 2, kind: input, shape index: {}]
  %s3 = inlined_call_operand.vmem [shape: f32[8,32], index: 3, kind: input, shape index: {}]
  %s4 = inlined_call_operand.vmem [shape: f32[8,1], index: 4, kind: input, shape index: {}]
  %s5 = inlined_call_operand.vmem [shape: f32[8,512], index: 5, kind: output, shape index: {}]
  %s6 = sld [smem:[#allocation0]]
  $region53: #{policy_forward.1} parent=0
    _
  %s8 = ssub.s32 1, %s6
  %s9 = scalar_select 0, %s8, %s6
  loop: start=0, step=1, limit=4
  $region2: #{policy_forward.1} parent=0 // loop_pre_header
    _
  $region3: #{policy_forward.1} parent=0 // loop_header
    %s11 = sphi 0, %s15
    %p12 = scmp.ge.s32.totalorder %s11, 4
    %s21 = sphi 0, %s23
    %s24 = sphi 0, %s21
    %s25 = sphi 0, %s24
    %s41 = sphi 0, %s25
    %s45 = sphi 0, %s45
    %s47 = sphi 0, %s45
    %s48 = sphi 0, %s47
    %s62 = sphi 0, %s48
    %s66 = sphi 0, %s66
    %s68 = sphi 0, %s66
    %s69 = sphi 0, %s68
    %s83 = sphi 0, %s69
    %s87 = sphi 0, %s87
    %s89 = sphi 0, %s87
    %s90 = sphi 0, %s89
    %s104 = sphi 0, %s90
    %s108 = sphi 0, %s108
    %s110 = sphi 0, %s108
    %s111 = sphi 0, %s110
    %s125 = sphi 0, %s111
    %s131 = sphi 0, %s133
    %s134 = sphi 0, %s131
    %s135 = sphi 0, %s134
    %s151 = sphi 0, %s135
  $region4: #{policy_forward.1} parent=0 // loop_header_branch
    %14 = sbr.rel (%p12) target = $region8
  $region5: #{policy_forward.1} parent=0 // loop_body
    %s16 = ssub.s32 %s11, 1
    %s17 = ssub.s32 %s11, 2
    %s18 = sadd.s32 %s11, 1
    %s19 = ssub.s32 %s11, %s18
    %p20 = scmp.eq.s32.totalorder %s19, 0
    %s22 = sadd.s32 %s21, 1
    %s23 = scalar_select %p20, %s21, %s22
    %p26 = pneg %p20
    %p27 = scmp.eq.s32.totalorder %s11, 1
    %p28 = por %p26, %p27
    %p29 = scmp.ne.s32.totalorder %s21, %s24
    %p30 = scmp.eq.s32.totalorder %s11, 0
    %p31 = por %p29, %p30
    %p32 = scmp.ne.s32.totalorder %s21, %s24
    %p33 = scmp.eq.s32.totalorder %s16, 1
    %p34 = por %p32, %p33
    %p35 = scmp.ne.s32.totalorder %s24, %s25
    %p36 = scmp.eq.s32.totalorder %s16, 0
    %p37 = por %p35, %p36
    %p38 = scmp.ne.s32.totalorder %s24, %s25
    %p39 = scmp.eq.s32.totalorder %s17, 1
    %p40 = por %p38, %p39
    %p42 = scmp.ne.s32.totalorder %s25, %s41
    %p43 = scmp.eq.s32.totalorder %s17, 0
    %p44 = por %p42, %p43
    %s46 = sadd.s32 %s45, 1
    %p49 = scmp.eq.s32.totalorder %s11, 1
    %p50 = scmp.ne.s32.totalorder %s45, %s47
    %p51 = scmp.eq.s32.totalorder %s11, 0
    %p52 = por %p50, %p51
    %p53 = scmp.ne.s32.totalorder %s45, %s47
    %p54 = scmp.eq.s32.totalorder %s16, 1
    %p55 = por %p53, %p54
    %p56 = scmp.ne.s32.totalorder %s47, %s48
    %p57 = scmp.eq.s32.totalorder %s16, 0
    %p58 = por %p56, %p57
    %p59 = scmp.ne.s32.totalorder %s47, %s48
    %p60 = scmp.eq.s32.totalorder %s17, 1
    %p61 = por %p59, %p60
    %p63 = scmp.ne.s32.totalorder %s48, %s62
    %p64 = scmp.eq.s32.totalorder %s17, 0
    %p65 = por %p63, %p64
    %s67 = sadd.s32 %s66, 1
    %p70 = scmp.eq.s32.totalorder %s11, 1
    %p71 = scmp.ne.s32.totalorder %s66, %s68
    %p72 = scmp.eq.s32.totalorder %s11, 0
    %p73 = por %p71, %p72
    %p74 = scmp.ne.s32.totalorder %s66, %s68
    %p75 = scmp.eq.s32.totalorder %s16, 1
    %p76 = por %p74, %p75
    %p77 = scmp.ne.s32.totalorder %s68, %s69
    %p78 = scmp.eq.s32.totalorder %s16, 0
    %p79 = por %p77, %p78
    %p80 = scmp.ne.s32.totalorder %s68, %s69
    %p81 = scmp.eq.s32.totalorder %s17, 1
    %p82 = por %p80, %p81
    %p84 = scmp.ne.s32.totalorder %s69, %s83
    %p85 = scmp.eq.s32.totalorder %s17, 0
    %p86 = por %p84, %p85
    %s88 = sadd.s32 %s87, 1
    %p91 = scmp.eq.s32.totalorder %s11, 1
    %p92 = scmp.ne.s32.totalorder %s87, %s89
    %p93 = scmp.eq.s32.totalorder %s11, 0
    %p94 = por %p92, %p93
    %p95 = scmp.ne.s32.totalorder %s87, %s89
    %p96 = scmp.eq.s32.totalorder %s16, 1
    %p97 = por %p95, %p96
    %p98 = scmp.ne.s32.totalorder %s89, %s90
    %p99 = scmp.eq.s32.totalorder %s16, 0
    %p100 = por %p98, %p99
    %p101 = scmp.ne.s32.totalorder %s89, %s90
    %p102 = scmp.eq.s32.totalorder %s17, 1
    %p103 = por %p101, %p102
    %p105 = scmp.ne.s32.totalorder %s90, %s104
    %p106 = scmp.eq.s32.totalorder %s17, 0
    %p107 = por %p105, %p106
    %s109 = sadd.s32 %s108, 1
    %p112 = scmp.eq.s32.totalorder %s11, 1
    %p113 = scmp.ne.s32.totalorder %s108, %s110
    %p114 = scmp.eq.s32.totalorder %s11, 0
    %p115 = por %p113, %p114
    %p116 = scmp.ne.s32.totalorder %s108, %s110
    %p117 = scmp.eq.s32.totalorder %s16, 1
    %p118 = por %p116, %p117
    %p119 = scmp.ne.s32.totalorder %s110, %s111
    %p120 = scmp.eq.s32.totalorder %s16, 0
    %p121 = por %p119, %p120
    %p122 = scmp.ne.s32.totalorder %s110, %s111
    %p123 = scmp.eq.s32.totalorder %s17, 1
    %p124 = por %p122, %p123
    %p126 = scmp.ne.s32.totalorder %s111, %s125
    %p127 = scmp.eq.s32.totalorder %s17, 0
    %p128 = por %p126, %p127
    %s129 = ssub.s32 %s11, %s18
    %p130 = scmp.eq.s32.totalorder %s129, 0
    %s132 = sadd.s32 %s131, 1
    %s133 = scalar_select %p130, %s131, %s132
    %p136 = pneg %p130
    %p137 = scmp.eq.s32.totalorder %s11, 1
    %p138 = por %p136, %p137
    %p139 = scmp.ne.s32.totalorder %s131, %s134
    %p140 = scmp.eq.s32.totalorder %s11, 0
    %p141 = por %p139, %p140
    %p142 = scmp.ne.s32.totalorder %s131, %s134
    %p143 = scmp.eq.s32.totalorder %s16, 1
    %p144 = por %p142, %p143
    %p145 = scmp.ne.s32.totalorder %s134, %s135
    %p146 = scmp.eq.s32.totalorder %s16, 0
    %p147 = por %p145, %p146
    %p148 = scmp.ne.s32.totalorder %s134, %s135
    %p149 = scmp.eq.s32.totalorder %s17, 1
    %p150 = por %p148, %p149
    %p152 = scmp.ne.s32.totalorder %s135, %s151
    %p153 = scmp.eq.s32.totalorder %s17, 0
    %p154 = por %p152, %p153
    %p155 = scmp.le.s32.totalorder 1, %s11
    %p156 = scmp.lt.s32.totalorder %s11, 3
    %p157 = pnand %p155, %p156
    %p158 = pneg %p157
    // Predicated region
    $region9: #{policy_forward.1} parent=5 // pred_check
      _
    $region10: #{policy_forward.1} parent=5 // pred_check_branch
      %160 = sbr.rel (%p157) target = $region12
    $region11: #{policy_forward.1} parent=5 // pred_region
      %s161 = ssub.s32 %s11, 1
      // Predicated region
      $region13: #{policy_forward.1} parent=11 // pred_check
        %p162 = pneg %p58
      $region14: #{policy_forward.1} parent=11 // pred_check_branch
        %164 = sbr.rel (%p162) target = $region16
      $region15: #{policy_forward.1} parent=11 // pred_region
        _
      $region16: #{policy_forward.1} parent=11 // pred_fallthru
        _
      // Predicated region
      $region17: #{policy_forward.1} parent=11 // pred_check
        %p165 = pneg %p79
      $region18: #{policy_forward.1} parent=11 // pred_check_branch
        %167 = sbr.rel (%p165) target = $region20
      $region19: #{policy_forward.1} parent=11 // pred_region
        _
      $region20: #{policy_forward.1} parent=11 // pred_fallthru
        _
      // Predicated region
      $region21: #{policy_forward.1} parent=11 // pred_check
        %p168 = pneg %p100
      $region22: #{policy_forward.1} parent=11 // pred_check_branch
        %170 = sbr.rel (%p168) target = $region24
      $region23: #{policy_forward.1} parent=11 // pred_region
        _
      $region24: #{policy_forward.1} parent=11 // pred_fallthru
        _
      // Predicated region
      $region25: #{policy_forward.1} parent=11 // pred_check
        %p171 = pneg %p121
      $region26: #{policy_forward.1} parent=11 // pred_check_branch
        %173 = sbr.rel (%p171) target = $region28
      $region27: #{policy_forward.1} parent=11 // pred_region
        _
      $region28: #{policy_forward.1} parent=11 // pred_fallthru
        _
    $region12: #{policy_forward.1} parent=5 // pred_fallthru
      _
    %p174 = scmp.lt.s32.totalorder %s11, 2
    // Predicated region
    $region29: #{policy_forward.1} parent=5 // pred_check
      %p175 = pneg %p174
    $region30: #{policy_forward.1} parent=5 // pred_check_branch
      %177 = sbr.rel (%p175) target = $region32
    $region31: #{policy_forward.1} parent=5 // pred_region
      // Predicated region
      $region33: #{policy_forward.1} parent=31 // pred_check
        %p178 = pneg %p31
      $region34: #{policy_forward.1} parent=31 // pred_check_branch
        %180 = sbr.rel (%p178) target = $region36
      $region35: #{policy_forward.1} parent=31 // pred_region
        %s181 = smul.u32 2, %s11
        %p182 = scmp.lt.s32.totalorder %s181, 3
        %s183 = scalar_select %p182, %s181, 3
        %s184 = smul.addr %s183, 2
        %s185 = scalar_lea.vmem %s0, %s184
        %s186 = smul.u32 2, %s11
      $region36: #{policy_forward.1} parent=31 // pred_fallthru
        _
    $region32: #{policy_forward.1} parent=5 // pred_fallthru
      _
    %p187 = scmp.le.s32.totalorder 1, %s11
    %p188 = scmp.lt.s32.totalorder %s11, 3
    %p189 = pnand %p187, %p188
    %p190 = pneg %p189
    // Predicated region
    $region37: #{policy_forward.1} parent=5 // pred_check
      _
    $region38: #{policy_forward.1} parent=5 // pred_check_branch
      %192 = sbr.rel (%p189) target = $region40
    $region39: #{policy_forward.1} parent=5 // pred_region
      %s193 = ssub.s32 %s11, 1
      %s194 = smul.u32 2, %s16
      %p195 = scmp.lt.s32.totalorder %s194, 3
      %s196 = scalar_select %p195, %s194, 3
      %s197 = smul.addr %s196, 2
      %s198 = scalar_lea.vmem %s0, %s197
      %p199 = pneg %p37
      %p200 = pneg %p34
      %p201 = pneg %p58
      %p202 = pneg %p55
      %p203 = pneg %p79
      %p204 = pneg %p76
      %p205 = pneg %p100
      %p206 = pneg %p97
      %p207 = pneg %p121
      %p208 = pneg %p118
      %p209 = pneg %p147
      %p210 = pneg %p144
      %s211 = smul.u32 2, %s16
      %p212 = scmp.lt.s32.totalorder %s211, 3
      %s213 = scalar_select %p212, %s211, 3
      %s214 = smul.addr %s213, 8
      %s215 = scalar_lea.vmem %s5, %s214
      %s216 = smul.u32 2, %s16
      %p217 = scmp.lt.s32.totalorder %s216, 3
      %s218 = scalar_select %p217, %s216, 3
      %s219 = smul.addr %s218, 2
      %s220 = scalar_lea.vmem %s0, %s219
      %s221 = smul.u32 2, %s16
      %s222 = smul.u32 2, %s16
      %p223 = scmp.lt.s32.totalorder %s222, 3
      %s224 = scalar_select %p223, %s222, 3
      %s225 = smul.addr %s224, 8
      %s226 = scalar_lea.vmem %s5, %s225
      %s227 = smul.u32 2, %s16
      %v228 = vld [vmem:[%s220] sm:$0xf]
      %v229 = vld [vmem:[%s1] sm:$0xff]
      %v230 = vld [vmem:[%s1 + $0x8] sm:$0xff]
      %v231 = vld [vmem:[%s1 + $0x10] sm:$0xff]
      %v232 = vld [vmem:[%s1 + $0x18] sm:$0xff]
      %v233 = vld [vmem:[%s2] sm:$0xff]
      %v234 = vld [vmem:[%s2 + $0x8] sm:$0xff]
      %v235 = vld [vmem:[%s2 + $0x10] sm:$0xff]
      %v236 = vld [vmem:[%s2 + $0x18] sm:$0xff]
      %238 = vset.pattern.permute.xlu0 0
      %239 = vperm.xlu0 %238, %v229
      %v240 = vpop.permute.xlu0 %239
      %243 = vset.pattern.permute.xlu0 0
      %244 = vperm.xlu0 %243, %v230
      %v245 = vpop.permute.xlu0 %244
      %248 = vset.pattern.permute.xlu0 0
      %249 = vperm.xlu0 %248, %v231
      %v250 = vpop.permute.xlu0 %249
      %253 = vset.pattern.permute.xlu0 0
      %254 = vperm.xlu0 %253, %v232
      %v255 = vpop.permute.xlu0 %254
      %v258 = vlaneseq
      %v259 = vshrl.u32 %v258, 7
      %v260 = vsub.s32 0, %v259
      %v261 = vrot.slane %v228, %v260
      %v262 = vlaneseq
      %v263 = vshrl.u32 %v262, 7
      %v264 = vsub.s32 2, %v263
      %v265 = vrot.slane %v228, %v264
      %v268 = vlaneseq
      %v269 = vshrl.u32 %v268, 7
      %v270 = vsub.s32 0, %v269
      %v271 = vrot.slane %v261, %v270
      %v272 = vlaneseq
      %v273 = vshrl.u32 %v272, 7
      %v274 = vsub.s32 0, %v273
      %v275 = vrot.slane %v265, %v274
      %v276 = vmul.f32 %v240, %v271
      %v277 = vmul.f32 %v240, %v275
      %v278 = vmul.f32 %v245, %v271
      %v279 = vmul.f32 %v245, %v275
      %v280 = vmul.f32 %v250, %v271
      %v281 = vmul.f32 %v250, %v275
      %v282 = vmul.f32 %v255, %v271
      %v283 = vmul.f32 %v255, %v275
      %285 = vset.pattern.permute.xlu0 0
      %286 = vperm.xlu0 %285, %v233
      %v287 = vpop.permute.xlu0 %286
      %290 = vset.pattern.permute.xlu0 0
      %291 = vperm.xlu0 %290, %v234
      %v292 = vpop.permute.xlu0 %291
      %295 = vset.pattern.permute.xlu0 0
      %296 = vperm.xlu0 %295, %v235
      %v297 = vpop.permute.xlu0 %296
      %300 = vset.pattern.permute.xlu0 0
      %301 = vperm.xlu0 %300, %v236
      %v302 = vpop.permute.xlu0 %301
      %v304 = vadd.f32 %v287, %v276
      %v305 = vadd.f32 %v287, %v277
      %v306 = vadd.f32 %v292, %v278
      %v307 = vadd.f32 %v292, %v279
      %v308 = vadd.f32 %v297, %v280
      %v309 = vadd.f32 %v297, %v281
      %v310 = vadd.f32 %v302, %v282
      %v311 = vadd.f32 %v302, %v283
      %312 = vset.pattern.permute.xlu0 1
      %313 = vperm.xlu0 %312, %v229
      %v314 = vpop.permute.xlu0 %313
      %316 = vset.pattern.permute.xlu0 1
      %317 = vperm.xlu0 %316, %v230
      %v318 = vpop.permute.xlu0 %317
      %320 = vset.pattern.permute.xlu0 1
      %321 = vperm.xlu0 %320, %v231
      %v322 = vpop.permute.xlu0 %321
      %324 = vset.pattern.permute.xlu0 1
      %325 = vperm.xlu0 %324, %v232
      %v326 = vpop.permute.xlu0 %325
      %v328 = vlaneseq
      %v329 = vshrl.u32 %v328, 7
      %v330 = vsub.s32 1, %v329
      %v331 = vrot.slane %v228, %v330
      %v332 = vlaneseq
      %v333 = vshrl.u32 %v332, 7
      %v334 = vsub.s32 3, %v333
      %v335 = vrot.slane %v228, %v334
      %v338 = vlaneseq
      %v339 = vshrl.u32 %v338, 7
      %v340 = vsub.s32 1, %v339
      %v341 = vrot.slane %v331, %v340
      %v342 = vlaneseq
      %v343 = vshrl.u32 %v342, 7
      %v344 = vsub.s32 1, %v343
      %v345 = vrot.slane %v335, %v344
      %v346 = vmul.f32 %v314, %v341
      %v347 = vmul.f32 %v314, %v345
      %v348 = vmul.f32 %v318, %v341
      %v349 = vmul.f32 %v318, %v345
      %v350 = vmul.f32 %v322, %v341
      %v351 = vmul.f32 %v322, %v345
      %v352 = vmul.f32 %v326, %v341
      %v353 = vmul.f32 %v326, %v345
      %v354 = vadd.f32 %v304, %v346
      %v355 = vadd.f32 %v305, %v347
      %v356 = vadd.f32 %v306, %v348
      %v357 = vadd.f32 %v307, %v349
      %v358 = vadd.f32 %v308, %v350
      %v359 = vadd.f32 %v309, %v351
      %v360 = vadd.f32 %v310, %v352
      %v361 = vadd.f32 %v311, %v353
      %v362 = vmax.f32 %v354, 0.0
      %v363 = vmax.f32 %v355, 0.0
      %v364 = vmax.f32 %v356, 0.0
      %v365 = vmax.f32 %v357, 0.0
      %v366 = vmax.f32 %v358, 0.0
      %v367 = vmax.f32 %v359, 0.0
      %v368 = vmax.f32 %v360, 0.0
      %v369 = vmax.f32 %v361, 0.0
      %v370 = vld [vmem:[%s3] sm:$0xff]
      %v371 = vld [vmem:[%s4] sm:$0xff]
      %373 = vset.pattern.permute.xlu0 0
      %374 = vperm.xlu0 %373, %v371
      %v375 = vpop.permute.xlu0 %374
      %vm377 = vcmask 261120
      %v379 = vsel %vm377, %v370, 0
      %381 = vmatprep.subr.mxu0 0.0
      %382 = vmatpush1.msra.mxu0 0.0
      %383 = vmatprep.subr.mxu0 0.0
      %384 = vmatpush1.msra.mxu0 0.0
      %385 = vmatprep.subr.mxu0 0.0
      %386 = vmatpush1.msra.mxu0 0.0
      %387 = vmatprep.subr.mxu0 0.0
      %388 = vmatpush1.msra.mxu0 0.0
      %389 = vmatprep.subr.mxu0 0.0
      %390 = vmatpush1.msra.mxu0 0.0
      %391 = vmatprep.subr.mxu0 0.0
      %392 = vmatpush1.msra.mxu0 0.0
      %393 = vmatprep.subr.mxu0 0.0
      %394 = vmatpush1.msra.mxu0 0.0
      %395 = vmatprep.subr.mxu0 0.0
      %396 = vmatpush1.msra.mxu0 0.0
      %397 = vmatprep.subr.mxu0 0.0
      %398 = vmatpush1.msra.mxu0 0.0
      %399 = vmatprep.subr.mxu0 0.0
      %400 = vmatpush1.msra.mxu0 0.0
      %401 = vmatprep.subr.mxu0 0.0
      %402 = vmatpush1.msra.mxu0 0.0
      %403 = vmatprep.subr.mxu0 0.0
      %404 = vmatpush1.msra.mxu0 0.0
      %405 = vmatprep.subr.mxu0 %v369
      %406 = vmatpush1.msra.mxu0 %v368
      %407 = vmatprep.subr.mxu0 %v367
      %408 = vmatpush1.msra.mxu0 %v366
      %409 = vmatprep.subr.mxu0 %v365
      %410 = vmatpush1.msra.mxu0 %v364
      %411 = vmatprep.subr.mxu0 %v363
      %412 = vmatpush1.msra.mxu0 %v362
      %413 = vmatprep.subr.mxu0 0.0
      %414 = vmatpush2.msra.mxu0 0.0
      %415 = vmatprep.subr.mxu0 0.0
      %416 = vmatpush2.msra.mxu0 0.0
      %417 = vmatprep.subr.mxu0 0.0
      %418 = vmatpush2.msra.mxu0 0.0
      %419 = vmatprep.subr.mxu0 0.0
      %420 = vmatpush2.msra.mxu0 0.0
      %421 = vmatprep.subr.mxu0 0.0
      %422 = vmatpush2.msra.mxu0 0.0
      %423 = vmatprep.subr.mxu0 0.0
      %424 = vmatpush2.msra.mxu0 0.0
      %425 = vmatprep.subr.mxu0 0.0
      %426 = vmatpush2.msra.mxu0 0.0
      %427 = vmatprep.subr.mxu0 0.0
      %428 = vmatpush2.msra.mxu0 0.0
      %429 = vmatprep.subr.mxu0 0.0
      %430 = vmatpush2.msra.mxu0 0.0
      %431 = vmatprep.subr.mxu0 0.0
      %432 = vmatpush2.msra.mxu0 0.0
      %433 = vmatprep.subr.mxu0 0.0
      %434 = vmatpush2.msra.mxu0 0.0
      %435 = vmatprep.subr.mxu0 0.0
      %436 = vmatpush2.msra.mxu0 0.0
      %437 = vmatprep.subr.mxu0 0.0
      %438 = vmatpush2.msra.mxu0 0.0
      %439 = vmatprep.subr.mxu0 0.0
      %440 = vmatpush2.msra.mxu0 0.0
      %441 = vmatprep.subr.mxu0 0.0
      %442 = vmatpush2.msra.mxu0 0.0
      %443 = vmatprep.subr.mxu0 0.0
      %444 = vmatpush2.msra.mxu0 0.0
      %445 = vmatprep.mubr.f32.mxu0 0.0
      %446 = vmatmul.mubr.f32.gmra.mxu0 %v379
      %v447 = vpop.f32.mrf.mxu0
      %v448 = vadd.f32 %v375, %v447
      %v449 = vpop.f32.mrf.mxu0
      %v450 = vadd.f32 %v375, %v449
      %451 = vdwg.mxu0
      %v452 = vrot.slane %v448, 4
      %v453 = vmax.f32 %v448, %v452
      %v454 = vrot.slane %v453, 2
      %v455 = vmax.f32 %v453, %v454
      %v456 = vrot.slane %v455, 1
      %v457 = vmax.f32 %v455, %v456
      %v458 = vrot.slane %v450, 4
      %v459 = vmax.f32 %v450, %v458
      %v460 = vrot.slane %v459, 2
      %v461 = vmax.f32 %v459, %v460
      %v462 = vrot.slane %v461, 1
      %v463 = vmax.f32 %v461, %v462
      %v464 = vsub.f32 %v448, %v457
      %v465 = vsub.f32 %v450, %v463
      %v466 = vmul.f32 %v464, 1.442695
      %v467 = vpow.pop %v466
      %v468 = vmul.f32 %v465, 1.442695
      %v469 = vpow.pop %v468
      %v470 = vrot.slane %v467, 4
      %v471 = vadd.f32 %v467, %v470
      %v472 = vrot.slane %v471, 2
      %v473 = vadd.f32 %v471, %v472
      %v474 = vrot.slane %v473, 1
      %v475 = vadd.f32 %v473, %v474
      %v476 = vrot.slane %v469, 4
      %v477 = vadd.f32 %v469, %v476
      %v478 = vrot.slane %v477, 2
      %v479 = vadd.f32 %v477, %v478
      %v480 = vrot.slane %v479, 1
      %v481 = vadd.f32 %v479, %v480
      %v482 = vrcp.pop %v475
      %v483 = vrcp.pop %v481
      %v484 = vmul.f32 %v467, %v482
      %v485 = vmul.f32 %v469, %v483
      %486 = vst [vmem:[%s226] sm:$0xff] %v484
      %487 = vst [vmem:[%s226 + $0x8] sm:$0xff] %v485
      %s488 = smul.u32 2, %s16
      %p489 = scmp.lt.s32.totalorder %s488, 3
      %s490 = scalar_select %p489, %s488, 3
      %s491 = smul.addr %s490, 8
      %s492 = scalar_lea.vmem %s5, %s491
      // Predicated region
      $region41: #{policy_forward.1} parent=39 // pred_check
        %p493 = pneg %p144
      $region42: #{policy_forward.1} parent=39 // pred_check_branch
        %495 = sbr.rel (%p493) target = $region44
      $region43: #{policy_forward.1} parent=39 // pred_region
        %s496 = smul.u32 2, %s16
      $region44: #{policy_forward.1} parent=39 // pred_fallthru
        _
    $region40: #{policy_forward.1} parent=5 // pred_fallthru
      _
    %p497 = scmp.le.s32.totalorder 2, %s11
    // Predicated region
    $region45: #{policy_forward.1} parent=5 // pred_check
      %p498 = pneg %p497
    $region46: #{policy_forward.1} parent=5 // pred_check_branch
      %500 = sbr.rel (%p498) target = $region48
    $region47: #{policy_forward.1} parent=5 // pred_region
      %s501 = ssub.s32 %s11, 2
      // Predicated region
      $region49: #{policy_forward.1} parent=47 // pred_check
        %p502 = pneg %p150
      $region50: #{policy_forward.1} parent=47 // pred_check_branch
        %504 = sbr.rel (%p502) target = $region52
      $region51: #{policy_forward.1} parent=47 // pred_region
        %s505 = smul.u32 2, %s17
        %p506 = scmp.lt.s32.totalorder %s505, 3
        %s507 = scalar_select %p506, %s505, 3
        %s508 = smul.addr %s507, 8
        %s509 = scalar_lea.vmem %s5, %s508
      $region52: #{policy_forward.1} parent=47 // pred_fallthru
        _
    $region48: #{policy_forward.1} parent=5 // pred_fallthru
      _
  $region6: #{policy_forward.1} parent=0 // loop_footer
    %s15 = sadd.s32 1, %s11
  $region7: #{policy_forward.1} parent=0 // loop_footer_branch
    %10 = sbr.rel target = $region3
  $region8: #{policy_forward.1} parent=0 // loop_exit
    _

</llo_original>
